<compile_context>
chip_gen: v5e
topology: v5e:2x2
jax: 0.10.0
libtpu: 0.0.40
codegen_flags: <defaults>
</compile_context>

<pallas_src>
import jax
import jax.numpy as jnp
from jax.experimental import pallas as pl
from jax.experimental.pallas import tpu as pltpu


_NEG_SLOPE = 0.2
# Conservative pipeline-buffer budget: fits the default scoped VMEM limit on
# v5e/v6e/v7x.  Explicit limit leaves headroom under v7x's 64 MiB physical VMEM.
_VMEM_BUDGET_BYTES = 32 * 1024 * 1024
_VMEM_LIMIT_BYTES = 48 * 1024 * 1024


def _leaky_relu(s):
    return jnp.where(s > 0, s, _NEG_SLOPE * s)


# -----------------------------------------------------------------------------
# Path 1: whole (C, N) slab per grid step (small / medium shapes).
# -----------------------------------------------------------------------------
def _slab_kernel(w_ref, x_ref, o_ref):
    # w_ref: (C, 1) f32 ; x_ref / o_ref: (C, N)   (batch dim squeezed away)
    xf = x_ref[...].astype(jnp.float32)
    # 1x1 conv (C -> 1): per-channel scale on the VPU + sublane reduce (XLU);
    # avoids a degenerate M=1 MXU matmul and any weight relayout.
    s = jnp.sum(xf * w_ref[...], axis=0, keepdims=True)          # (1, N) f32
    s = _leaky_relu(s)
    m = jnp.max(s, axis=-1, keepdims=True)
    e = jnp.exp(s - m)
    p = e * pl.reciprocal(jnp.sum(e, axis=-1, keepdims=True), approx=True)
    o_ref[...] = (xf + p).astype(o_ref.dtype)


def _attention_point_slab(x, w):
    B, C, N = x.shape
    itemsize = jnp.dtype(x.dtype).itemsize
    cost = pl.CostEstimate(
        flops=3 * B * C * N + 4 * B * N,
        transcendentals=B * N,
        bytes_accessed=2 * B * C * N * itemsize + C * 4,
    )
    return pl.pallas_call(
        _slab_kernel,
        out_shape=jax.ShapeDtypeStruct((B, C, N), x.dtype),
        grid_spec=pltpu.PrefetchScalarGridSpec(
            num_scalar_prefetch=0,
            grid=(B,),
            in_specs=[
                pl.BlockSpec((C, 1), lambda b: (0, 0)),                    # weight
                pl.BlockSpec((pl.Squeezed(), C, N), lambda b: (b, 0, 0)),  # x[b]
            ],
            out_specs=pl.BlockSpec((pl.Squeezed(), C, N), lambda b: (b, 0, 0)),
        ),
        compiler_params=pltpu.CompilerParams(
            dimension_semantics=("parallel",),
            vmem_limit_bytes=_VMEM_LIMIT_BYTES,
        ),
        cost_estimate=cost,
    )(w, x)


# -----------------------------------------------------------------------------
# Path 2: two-pass N-tiled kernel for shapes whose slab exceeds the VMEM budget.
# Grid = (B, phase, N // TN).
# -----------------------------------------------------------------------------
def _tiled_kernel(w_ref, x_ref, o_ref, s_ref):
    ph = pl.program_id(1)
    nt = pl.program_id(2)
    n_tiles = pl.num_programs(2)
    tn = x_ref.shape[-1]
    start = pl.multiple_of(nt * tn, tn)   # 128-aligned lane offset into s_ref

    @pl.when(ph == 0)
    def _():
        xf = x_ref[...].astype(jnp.float32)                        # (C, TN)
        s_tile = jnp.sum(xf * w_ref[...], axis=0, keepdims=True)   # (1, TN)
        s_ref[:, pl.ds(start, tn)] = _leaky_relu(s_tile)

        @pl.when(nt == n_tiles - 1)
        def _():
            s = s_ref[...]                                         # (1, N)
            m = jnp.max(s, axis=-1, keepdims=True)
            e = jnp.exp(s - m)
            s_ref[...] = e * pl.reciprocal(
                jnp.sum(e, axis=-1, keepdims=True), approx=True)

    @pl.when(ph == 1)
    def _():
        p_tile = s_ref[:, pl.ds(start, tn)]                        # (1, TN)
        o_ref[...] = (x_ref[...].astype(jnp.float32) + p_tile).astype(o_ref.dtype)


def _attention_point_tiled(x, w, tile_n):
    B, C, N = x.shape
    n_tiles = N // tile_n
    itemsize = jnp.dtype(x.dtype).itemsize
    cost = pl.CostEstimate(
        flops=5 * B * C * N + 4 * B * N,
        transcendentals=B * N,
        bytes_accessed=3 * B * C * N * itemsize + C * 4,   # x read twice
    )
    x_spec = pl.BlockSpec(
        (pl.Squeezed(), C, tile_n),
        lambda b, ph, t: (b, 0, t),          # same x tile in both phases
        pipeline_mode=pl.Buffered(3),        # deeper buffering hides the re-read
    )
    o_spec = pl.BlockSpec(
        (pl.Squeezed(), C, tile_n),
        # Phase 0 never writes the output; park the (resident) out window on
        # tile 0 so no garbage block is ever flushed and no extra HBM writes
        # happen.  Phase 1 walks the tiles and each flush carries final data.
        lambda b, ph, t: (b, 0, t * ph),
    )
    return pl.pallas_call(
        _tiled_kernel,
        out_shape=jax.ShapeDtypeStruct((B, C, N), x.dtype),
        grid_spec=pltpu.PrefetchScalarGridSpec(
            num_scalar_prefetch=0,
            grid=(B, 2, n_tiles),
            in_specs=[
                pl.BlockSpec((C, 1), lambda b, ph, t: (0, 0)),
                x_spec,
            ],
            out_specs=o_spec,
            scratch_shapes=[pltpu.VMEM((1, N), jnp.float32)],
        ),
        compiler_params=pltpu.CompilerParams(
            # Batch is safe to megacore-shard; phase and tile axes carry the
            # scratch dependence so they must stay "arbitrary".
            dimension_semantics=("parallel", "arbitrary", "arbitrary"),
            vmem_limit_bytes=_VMEM_LIMIT_BYTES,
        ),
        cost_estimate=cost,
    )(w, x)


def _pick_tile_n(C, N, itemsize, budget_bytes):
    """Largest lane-dense (multiple of 128) divisor of N whose per-step
    working set (3 x-buffers + 2 out-buffers + score scratch) fits the budget."""
    best = None
    fixed = 8 * N * 4 + 8 * C * 4   # sublane-padded score scratch + weight
    tn = 128
    while tn <= N:
        if N % tn == 0 and 5 * C * tn * itemsize + fixed <= budget_bytes:
            best = tn
        tn += 128
    return best


def attention_point(x, weight, *, tile_n=None):
    """x: (B, C, N); weight: Conv1d weight of shape (1, C, 1), (1, C) or (C,)."""
    B, C, N = x.shape
    w = jnp.asarray(weight, jnp.float32).reshape(C, 1)
    itemsize = jnp.dtype(x.dtype).itemsize

    if tile_n is None:
        # Whole-slab path whenever double-buffered (in + out) slabs fit.
        slab_bytes = 4 * C * N * itemsize + 8 * C * 4
        if slab_bytes <= _VMEM_BUDGET_BYTES:
            return _attention_point_slab(x, w)
        tile_n = _pick_tile_n(C, N, itemsize, _VMEM_BUDGET_BYTES)
        if tile_n is None:
            # TODO(synk): N not 128-divisible with an over-budget slab -> would
            # need N padding or C tiling; fall back to the slab path.
            return _attention_point_slab(x, w)
    else:
        assert N % tile_n == 0 and (tile_n % 128 == 0 or tile_n == N)

    if tile_n == N:
        return _attention_point_slab(x, w)
    return _attention_point_tiled(x, w, tile_n)


def reference(x, weight):
    w = jnp.asarray(weight, jnp.float32).reshape(1, -1)
    s = jnp.einsum("oc,bcn->bon", w, x)               # (B, 1, N)
    s = jnp.where(s > 0, s, _NEG_SLOPE * s)           # LeakyReLU(0.2)
    p = jax.nn.softmax(s, axis=2)                     # softmax over points
    return x + p


if __name__ == "__main__":
    key = jax.random.PRNGKey(0)

    def run_case(kx, kw, B, C, N, tile_n=None):
        x = jax.random.normal(kx, (B, C, N), dtype=jnp.float32)
        # PyTorch Conv1d default init scale: U(-1/sqrt(C), 1/sqrt(C)).
        bound = 1.0 / float(C) ** 0.5
        weight = jax.random.uniform(kw, (1, C), minval=-bound, maxval=bound,
                                    dtype=jnp.float32)
        out = jax.block_until_ready(attention_point(x, weight, tile_n=tile_n))
        ref = reference(x, weight)
        assert out.shape == (B, C, N)
        # Tolerance loosened slightly for the EUP approximate reciprocal.
        assert jnp.allclose(out, ref, atol=1e-3, rtol=1e-3), \
            float(jnp.max(jnp.abs(out - ref)))

    k1, k2, k3, k4 = jax.random.split(key, 4)
    # Small demo shape from the module spec (single-slab path).
    run_case(k1, k2, B=2, C=4, N=16)
    # Lane-dense shape forcing the two-pass N-tiled path (2 tiles of 128).
    run_case(k3, k4, B=2, C=8, N=256, tile_n=128)

    print("KERNEL_OK")
</pallas_src>

<mosaic_0001>
module attributes {stable_mosaic.version = 11 : i64} {
  func.func @_slab_kernel(%arg0: i32, %arg1: memref<4x1xf32, #tpu.memory_space<vmem>>, %arg2: memref<1x4x16xf32, #tpu.memory_space<vmem>>, %arg3: memref<1x4x16xf32, #tpu.memory_space<vmem>>) attributes {dimension_semantics = [#tpu.dimension_semantics<parallel>], iteration_bounds = array<i64: 2>, scalar_prefetch = 0 : i64, scratch_operands = 0 : i64, tpu.core_type = #tpu.core_type<tc>, window_params = [{pipeline_mode = #tpu.pipeline_mode<synchronous>, transform_indices = @transform_0, window_bounds = array<i64: 4, 1>}, {transform_indices = @transform_1, window_bounds = array<i64: 1, 4, 16>}, {transform_indices = @transform_2, window_bounds = array<i64: 1, 4, 16>}]} {
    %c0 = arith.constant 0 : index
    %c0_0 = arith.constant 0 : index
    %c0_1 = arith.constant 0 : index
    %0 = vector.load %arg2[%c0, %c0_0, %c0_1] : memref<1x4x16xf32, #tpu.memory_space<vmem>>, vector<1x4x16xf32>
    %1 = vector.shape_cast %0 : vector<1x4x16xf32> to vector<4x16xf32>
    %c0_2 = arith.constant 0 : index
    %c0_3 = arith.constant 0 : index
    %2 = vector.load %arg1[%c0_2, %c0_3] : memref<4x1xf32, #tpu.memory_space<vmem>>, vector<4x1xf32>
    %3 = vector.broadcast %2 : vector<4x1xf32> to vector<4x16xf32>
    %4 = arith.mulf %1, %3 : vector<4x16xf32>
    %cst = arith.constant dense<0.000000e+00> : vector<16xf32>
    %5 = vector.multi_reduction <add>, %4, %cst [0] : vector<4x16xf32> to vector<16xf32>
    %6 = vector.shape_cast %5 : vector<16xf32> to vector<1x16xf32>
    %cst_4 = arith.constant 0.000000e+00 : f32
    %7 = vector.broadcast %cst_4 : f32 to vector<1x16xf32>
    %8 = arith.cmpf ogt, %6, %7 : vector<1x16xf32>
    %cst_5 = arith.constant 2.000000e-01 : f32
    %9 = vector.broadcast %cst_5 : f32 to vector<1x16xf32>
    %10 = arith.mulf %9, %6 : vector<1x16xf32>
    %11 = arith.select %8, %6, %10 : vector<1x16xi1>, vector<1x16xf32>
    %cst_6 = arith.constant dense<0xFF800000> : vector<1xf32>
    %12 = vector.multi_reduction <maximumf>, %11, %cst_6 [1] : vector<1x16xf32> to vector<1xf32>
    %13 = vector.shape_cast %12 : vector<1xf32> to vector<1x1xf32>
    %14 = vector.broadcast %13 : vector<1x1xf32> to vector<1x16xf32>
    %15 = arith.subf %11, %14 : vector<1x16xf32>
    %16 = math.exp %15 : vector<1x16xf32>
    %cst_7 = arith.constant dense<0.000000e+00> : vector<1xf32>
    %17 = vector.multi_reduction <add>, %16, %cst_7 [1] : vector<1x16xf32> to vector<1xf32>
    %18 = vector.shape_cast %17 : vector<1xf32> to vector<1x1xf32>
    %19 = tpu.reciprocal %18 {approx = true} : vector<1x1xf32> -> vector<1x1xf32>
    %20 = vector.broadcast %19 : vector<1x1xf32> to vector<1x16xf32>
    %21 = arith.mulf %16, %20 : vector<1x16xf32>
    %22 = vector.broadcast %21 : vector<1x16xf32> to vector<4x16xf32>
    %23 = arith.addf %1, %22 : vector<4x16xf32>
    %c0_8 = arith.constant 0 : index
    %c0_9 = arith.constant 0 : index
    %c0_10 = arith.constant 0 : index
    %24 = vector.load %arg3[%c0_8, %c0_9, %c0_10] : memref<1x4x16xf32, #tpu.memory_space<vmem>>, vector<1x4x16xf32>
    %25 = vector.shape_cast %24 : vector<1x4x16xf32> to vector<4x16xf32>
    %26 = vector.shape_cast %23 : vector<4x16xf32> to vector<1x4x16xf32>
    tpu.vector_store %arg3[%c0_8, %c0_9, %c0_10], %26 {strides = array<i32>} : memref<1x4x16xf32, #tpu.memory_space<vmem>>, vector<1x4x16xf32>,
    return
  }
  func.func @transform_0(%arg0: i32) -> (i32, i32) {
    %c0_i32 = arith.constant 0 : i32
    %c0_i32_0 = arith.constant 0 : i32
    %c0_i32_1 = arith.constant 0 : i32
    return %c0_i32, %c0_i32_0 : i32, i32
  }
  func.func @transform_1(%arg0: i32) -> (i32, i32, i32) {
    %c0_i32 = arith.constant 0 : i32
    %c0_i32_0 = arith.constant 0 : i32
    %c0_i32_1 = arith.constant 0 : i32
    return %arg0, %c0_i32, %c0_i32_0 : i32, i32, i32
  }
  func.func @transform_2(%arg0: i32) -> (i32, i32, i32) {
    %c0_i32 = arith.constant 0 : i32
    %c0_i32_0 = arith.constant 0 : i32
    %c0_i32_1 = arith.constant 0 : i32
    return %arg0, %c0_i32, %c0_i32_0 : i32, i32, i32
  }
}

</mosaic_0001>

<llo_original>
// kernel: tpu_custom_call.1
$region0: #{tpu_custom_call.1}
  #allocation0 [shape = 'u32[]', space=smem, size = 0x4, offset = 0x4, fixed_abs, tag = 'smem constant byte address 0x4 - core index']
  #allocation1 [shape = 'u32[72,128]{1,0:T(1,128)}', space=vmem, size = 0x9000, scoped, tag = 'internal scratch']
  %s0 = inlined_call_operand.vmem [shape: f32[4,1], index: 0, kind: input, shape index: {}]
  %s1 = inlined_call_operand.hbm [shape: f32[2,4,16], index: 1, kind: input, shape index: {}]
  %s2 = inlined_call_operand.hbm [shape: f32[2,4,16], index: 2, kind: output, shape index: {}]
  %s3 = sld [smem:[#allocation0]]
  $region45: #{tpu_custom_call.1} parent=0
    _
  %s5 = ssub.s32 1, %s3
  %s6 = scalar_select 0, %s5, %s3
  $region1: #{tpu_custom_call.1} parent=0
    #allocation2 [shape = 'u8[4096]{0}', space=vmem, size = 0x1000, scoped, tag = 'input window, operand 1']
    #allocation3 [shape = 's32[2]{0}', space=sflag, size = 0x8, scoped, tag = 'scoped memory for tpu_custom_call.1']
    #allocation4 [shape = 's32[2]{0}', space=sflag, size = 0x8, scoped, tag = 'scoped memory for tpu_custom_call.1']
    #allocation5 [shape = 'u8[4096]{0}', space=vmem, size = 0x1000, scoped, tag = 'output window, operand 0']
    %7 = vsyncpa [#allocation3], 0
    %s8 = scalar_lea.sflag [#allocation3], 1
    %9 = vsyncpa %s8, 0
    %10 = vsyncpa [#allocation4], 0
    %s11 = scalar_lea.sflag [#allocation4], 1
    %12 = vsyncpa %s11, 0
    loop: start=0, step=1, limit=4
    $region2: #{tpu_custom_call.1} parent=1 // loop_pre_header
      _
    $region3: #{tpu_custom_call.1} parent=1 // loop_header
      %s14 = sphi 0, %s18
      %p15 = scmp.ge.s32.totalorder %s14, 4
      %s22 = sphi 0, %s22
      %s24 = sphi 0, %s22
      %s25 = sphi 0, %s24
      %s39 = sphi 0, %s25
      %s45 = sphi 0, %s47
      %s48 = sphi 0, %s45
      %s49 = sphi 0, %s48
      %s65 = sphi 0, %s49
      %s71 = sphi 0, %s73
      %s74 = sphi 0, %s71
      %s75 = sphi 0, %s74
      %s91 = sphi 0, %s75
    $region4: #{tpu_custom_call.1} parent=1 // loop_header_branch
      %17 = sbr.rel (%p15) target = $region8
    $region5: #{tpu_custom_call.1} parent=1 // loop_body
      %s19 = ssub.s32 %s14, 1
      %s20 = ssub.s32 %s14, 2
      %s21 = sadd.s32 %s14, 1
      %s23 = sadd.s32 %s22, 1
      %p26 = scmp.eq.s32.totalorder %s14, 1
      %p27 = scmp.ne.s32.totalorder %s22, %s24
      %p28 = scmp.eq.s32.totalorder %s14, 0
      %p29 = por %p27, %p28
      %p30 = scmp.ne.s32.totalorder %s22, %s24
      %p31 = scmp.eq.s32.totalorder %s19, 1
      %p32 = por %p30, %p31
      %p33 = scmp.ne.s32.totalorder %s24, %s25
      %p34 = scmp.eq.s32.totalorder %s19, 0
      %p35 = por %p33, %p34
      %p36 = scmp.ne.s32.totalorder %s24, %s25
      %p37 = scmp.eq.s32.totalorder %s20, 1
      %p38 = por %p36, %p37
      %p40 = scmp.ne.s32.totalorder %s25, %s39
      %p41 = scmp.eq.s32.totalorder %s20, 0
      %p42 = por %p40, %p41
      %s43 = ssub.s32 %s14, %s21
      %p44 = scmp.eq.s32.totalorder %s43, 0
      %s46 = sadd.s32 %s45, 1
      %s47 = scalar_select %p44, %s45, %s46
      %p50 = pneg %p44
      %p51 = scmp.eq.s32.totalorder %s14, 1
      %p52 = por %p50, %p51
      %p53 = scmp.ne.s32.totalorder %s45, %s48
      %p54 = scmp.eq.s32.totalorder %s14, 0
      %p55 = por %p53, %p54
      %p56 = scmp.ne.s32.totalorder %s45, %s48
      %p57 = scmp.eq.s32.totalorder %s19, 1
      %p58 = por %p56, %p57
      %p59 = scmp.ne.s32.totalorder %s48, %s49
      %p60 = scmp.eq.s32.totalorder %s19, 0
      %p61 = por %p59, %p60
      %p62 = scmp.ne.s32.totalorder %s48, %s49
      %p63 = scmp.eq.s32.totalorder %s20, 1
      %p64 = por %p62, %p63
      %p66 = scmp.ne.s32.totalorder %s49, %s65
      %p67 = scmp.eq.s32.totalorder %s20, 0
      %p68 = por %p66, %p67
      %s69 = ssub.s32 %s14, %s21
      %p70 = scmp.eq.s32.totalorder %s69, 0
      %s72 = sadd.s32 %s71, 1
      %s73 = scalar_select %p70, %s71, %s72
      %p76 = pneg %p70
      %p77 = scmp.eq.s32.totalorder %s14, 1
      %p78 = por %p76, %p77
      %p79 = scmp.ne.s32.totalorder %s71, %s74
      %p80 = scmp.eq.s32.totalorder %s14, 0
      %p81 = por %p79, %p80
      %p82 = scmp.ne.s32.totalorder %s71, %s74
      %p83 = scmp.eq.s32.totalorder %s19, 1
      %p84 = por %p82, %p83
      %p85 = scmp.ne.s32.totalorder %s74, %s75
      %p86 = scmp.eq.s32.totalorder %s19, 0
      %p87 = por %p85, %p86
      %p88 = scmp.ne.s32.totalorder %s74, %s75
      %p89 = scmp.eq.s32.totalorder %s20, 1
      %p90 = por %p88, %p89
      %p92 = scmp.ne.s32.totalorder %s75, %s91
      %p93 = scmp.eq.s32.totalorder %s20, 0
      %p94 = por %p92, %p93
      %p95 = scmp.le.s32.totalorder 1, %s14
      %p96 = scmp.lt.s32.totalorder %s14, 3
      %p97 = pnand %p95, %p96
      %p98 = pneg %p97
      // Predicated region
      $region9: #{tpu_custom_call.1} parent=5 // pred_check
        _
      $region10: #{tpu_custom_call.1} parent=5 // pred_check_branch
        %100 = sbr.rel (%p97) target = $region12
      $region11: #{tpu_custom_call.1} parent=5 // pred_region
        %s101 = ssub.s32 %s14, 1
        // Predicated region
        $region13: #{tpu_custom_call.1} parent=11 // pred_check
          %p102 = pneg %p35
        $region14: #{tpu_custom_call.1} parent=11 // pred_check_branch
          %104 = sbr.rel (%p102) target = $region16
        $region15: #{tpu_custom_call.1} parent=11 // pred_region
          _
        $region16: #{tpu_custom_call.1} parent=11 // pred_fallthru
          _
      $region12: #{tpu_custom_call.1} parent=5 // pred_fallthru
        _
      %p105 = scmp.lt.s32.totalorder %s14, 2
      // Predicated region
      $region17: #{tpu_custom_call.1} parent=5 // pred_check
        %p106 = pneg %p105
      $region18: #{tpu_custom_call.1} parent=5 // pred_check_branch
        %108 = sbr.rel (%p106) target = $region20
      $region19: #{tpu_custom_call.1} parent=5 // pred_region
        // Predicated region
        $region21: #{tpu_custom_call.1} parent=19 // pred_check
          %p109 = pneg %p55
        $region22: #{tpu_custom_call.1} parent=19 // pred_check_branch
          %111 = sbr.rel (%p109) target = $region24
        $region23: #{tpu_custom_call.1} parent=19 // pred_region
          %s112 = sand.u32 %s45, 1
          %s113 = scalar_lea.sflag [#allocation3], %s112
          %s114 = sand.u32 %s45, 1
          %s115 = smul.addr %s114, 4
          %s116 = scalar_lea.vmem [#allocation2], %s115
          %118 = vsyncadd %s113, 0
          %s119 = smul.addr %s14, 4
          %s120 = scalar_lea.hbm %s1, %s119
          %s122 = sshll.u32 %s120, 4
          %s123 = int_to_ptr.hbm [resolvable:$true] %s122
          %s124 = sshll.u32 %s116, 4
          %s125 = int_to_ptr.vmem [resolvable:$true] %s124
          %127 = dma.hbm_to_vmem [thread:$0]  %s123, 64, %s125, %s113
        $region24: #{tpu_custom_call.1} parent=19 // pred_fallthru
          _
      $region20: #{tpu_custom_call.1} parent=5 // pred_fallthru
        _
      %p128 = scmp.le.s32.totalorder 1, %s14
      %p129 = scmp.lt.s32.totalorder %s14, 3
      %p130 = pnand %p128, %p129
      %p131 = pneg %p130
      // Predicated region
      $region25: #{tpu_custom_call.1} parent=5 // pred_check
        _
      $region26: #{tpu_custom_call.1} parent=5 // pred_check_branch
        %133 = sbr.rel (%p130) target = $region28
      $region27: #{tpu_custom_call.1} parent=5 // pred_region
        %s134 = ssub.s32 %s14, 1
        %s135 = sand.u32 %s48, 1
        %s136 = scalar_lea.sflag [#allocation3], %s135
        %s137 = sand.u32 %s48, 1
        %s138 = smul.addr %s137, 4
        %s139 = scalar_lea.vmem [#allocation2], %s138
        // Predicated region
        $region29: #{tpu_custom_call.1} parent=27 // pred_check
          %p140 = pneg %p61
        $region30: #{tpu_custom_call.1} parent=27 // pred_check_branch
          %142 = sbr.rel (%p140) target = $region32
        $region31: #{tpu_custom_call.1} parent=27 // pred_region
          %144 = dma.done %s136, 64
        $region32: #{tpu_custom_call.1} parent=27 // pred_fallthru
          _
        %p145 = pneg %p35
        %p146 = pneg %p32
        %s147 = sand.u32 %s48, 1
        %s148 = scalar_lea.sflag [#allocation3], %s147
        %s149 = sand.u32 %s48, 1
        %s150 = smul.addr %s149, 4
        %s151 = scalar_lea.vmem [#allocation2], %s150
        %p152 = pneg %p61
        %p153 = pneg %p58
        %p154 = pneg %p87
        %p155 = pneg %p84
        %s156 = sand.u32 %s74, 1
        %s157 = scalar_lea.sflag [#allocation4], %s156
        %s158 = sand.u32 %s74, 1
        %s159 = smul.addr %s158, 4
        %s160 = scalar_lea.vmem [#allocation5], %s159
        %v161 = vld [vmem:[%s139] sm:$0xf]
        %v162 = vld [vmem:[%s0] sm:$0xf]
        %164 = vset.pattern.permute.xlu0 0
        %165 = vperm.xlu0 %164, %v162
        %v166 = vpop.permute.xlu0 %165
        %v168 = vmul.f32 %v161, %v166
        %vm169 = vcmask 125952
        %v170 = vsel %vm169, %v168, 0.0
        %v171 = vrot.slane %v170, 4
        %v172 = vadd.f32 %v170, %v171
        %v173 = vrot.slane %v172, 2
        %v174 = vadd.f32 %v172, %v173
        %v175 = vrot.slane %v174, 1
        %v176 = vadd.f32 %v174, %v175
        %vm177 = vcmp.gt.f32.partialorder %v176, 0.0
        %v178 = vmul.f32 %v176, 0.2
        %v179 = vsel %vm177, %v176, %v178
        %vm180 = vcmask 130048
        %v181 = vsel %vm180, %v179, -inf
        %182 = vmax.xlane.f32.xlu0 %v181
        %v183 = vpop.xlane.xlu0 %182
        %v184 = vsub.f32 %v179, %v183
        %v185 = vmul.f32 %v184, 1.442695
        %v186 = vpow.pop %v185
        %v187 = vsel %vm180, %v186, 0.0
        %188 = vadd.xlane.f32.xlu0 %v187
        %v189 = vpop.xlane.xlu0 %188
        %v190 = vrcp.pop %v189
        %v191 = vmul.f32 %v186, %v190
        %v192 = vadd.f32 %v161, %v191
        %193 = vst.msk [vmem:[%s160] sm:$0xf] %vm169, %v192
        %s194 = sand.u32 %s74, 1
        %s195 = scalar_lea.sflag [#allocation4], %s194
        %s196 = sand.u32 %s74, 1
        %s197 = smul.addr %s196, 4
        %s198 = scalar_lea.vmem [#allocation5], %s197
        // Predicated region
        $region33: #{tpu_custom_call.1} parent=27 // pred_check
          %p199 = pneg %p84
        $region34: #{tpu_custom_call.1} parent=27 // pred_check_branch
          %201 = sbr.rel (%p199) target = $region36
        $region35: #{tpu_custom_call.1} parent=27 // pred_region
          %203 = vsyncadd %s195, 0
          %s204 = smul.addr %s19, 4
          %s205 = scalar_lea.hbm %s2, %s204
          %s207 = sshll.u32 %s198, 4
          %s208 = int_to_ptr.vmem [resolvable:$true] %s207
          %s209 = sshll.u32 %s205, 4
          %s210 = int_to_ptr.hbm [resolvable:$true] %s209
          %212 = dma.vmem_to_hbm [thread:$0]  %s208, 64, %s210, %s195
        $region36: #{tpu_custom_call.1} parent=27 // pred_fallthru
          _
      $region28: #{tpu_custom_call.1} parent=5 // pred_fallthru
        _
      %p213 = scmp.le.s32.totalorder 2, %s14
      // Predicated region
      $region37: #{tpu_custom_call.1} parent=5 // pred_check
        %p214 = pneg %p213
      $region38: #{tpu_custom_call.1} parent=5 // pred_check_branch
        %216 = sbr.rel (%p214) target = $region40
      $region39: #{tpu_custom_call.1} parent=5 // pred_region
        %s217 = ssub.s32 %s14, 2
        // Predicated region
        $region41: #{tpu_custom_call.1} parent=39 // pred_check
          %p218 = pneg %p90
        $region42: #{tpu_custom_call.1} parent=39 // pred_check_branch
          %220 = sbr.rel (%p218) target = $region44
        $region43: #{tpu_custom_call.1} parent=39 // pred_region
          %s221 = sand.u32 %s75, 1
          %s222 = scalar_lea.sflag [#allocation4], %s221
          %s223 = sand.u32 %s75, 1
          %s224 = smul.addr %s223, 4
          %s225 = scalar_lea.vmem [#allocation5], %s224
          %227 = dma.done %s222, 64
        $region44: #{tpu_custom_call.1} parent=39 // pred_fallthru
          _
      $region40: #{tpu_custom_call.1} parent=5 // pred_fallthru
        _
    $region6: #{tpu_custom_call.1} parent=1 // loop_footer
      %s18 = sadd.s32 1, %s14
    $region7: #{tpu_custom_call.1} parent=1 // loop_footer_branch
      %13 = sbr.rel target = $region3
    $region8: #{tpu_custom_call.1} parent=1 // loop_exit
      _
    %228 = vsyncpa [#allocation3], 1
    %s229 = scalar_lea.sflag [#allocation3], 1
    %230 = vsyncpa %s229, 1
    %231 = vsyncpa [#allocation4], 1
    %s232 = scalar_lea.sflag [#allocation4], 1
    %233 = vsyncpa %s232, 1

</llo_original>
